<compile_context>
chip_gen: v5e
topology: v5e:2x2
jax: 0.10.0
libtpu: 0.0.40
codegen_flags: <defaults>
</compile_context>

<pallas_src>
import jax
import jax.numpy as jnp
from jax.experimental import pallas as pl
from jax.experimental.pallas import tpu as pltpu

# ----------------------------- model sizes ---------------------------------
USER_EMB, OCC_EMB, MOVIE_EMB = 16, 8, 16
USER_TOWER, MOVIE_TOWER, GENRE_TOWER, VISION_TOWER = 32, 32, 16, 32
VISION_FEATS = 1280              # efficientnet_b0.num_features
FUSION_HIDDEN = 64

NUM_USERS, NUM_MOVIES, NUM_OCCUPATIONS, NUM_GENRES = 50, 40, 21, 18

USER_IN = USER_EMB + 1 + 1 + OCC_EMB               # 26
MOVIE_IN = MOVIE_EMB + 1                           # 17
GENRE_IN = NUM_GENRES                              # 18
UMG_IN = USER_IN + MOVIE_IN + GENRE_IN             # 61
UMG_OUT = USER_TOWER + MOVIE_TOWER + GENRE_TOWER   # 80
FUSION_IN = UMG_OUT + VISION_TOWER                 # 112


# ------------------------------ Pallas kernel -------------------------------
def _recommender_kernel(x_umg_ref, x_v_ref,
                        w_umg_ref, b_umg_ref,
                        w_v_ref, b_v_ref,
                        w_f1u_ref, w_f1v_ref, b_f1_ref,
                        w_f2_ref, b_f2_ref,
                        out_ref):
    f32, bf16 = jnp.float32, jnp.bfloat16

    # fused user/movie/genre towers: one block-diagonal Linear + ReLU (bf16 MXU)
    umg = jnp.maximum(
        jnp.dot(x_umg_ref[...], w_umg_ref[...], preferred_element_type=f32)
        + b_umg_ref[...], 0.0)                                    # [TB, 80] f32

    # vision tower: activations cast to bf16 in-kernel (no wrapper HBM pass)
    xv = x_v_ref[...].astype(bf16)
    v = jnp.maximum(
        jnp.dot(xv, w_v_ref[...], preferred_element_type=f32)
        + b_v_ref[...], 0.0)                                      # [TB, 32] f32

    # fusion layer 1: two dots summed into one accumulator (pre-split weight)
    # instead of a lane-axis concat of [umg, v].
    h = jnp.maximum(
        jnp.dot(umg.astype(bf16), w_f1u_ref[...], preferred_element_type=f32)
        + jnp.dot(v.astype(bf16), w_f1v_ref[...], preferred_element_type=f32)
        + b_f1_ref[...], 0.0)                                     # [TB, 64] f32
    # Dropout(0.2) is identity at inference time (evaluation script).

    # fusion layer 2 (N=1): VPU multiply + lane reduce instead of MXU dot
    out_ref[...] = (jnp.sum(h * w_f2_ref[...], axis=-1, keepdims=True)
                    + b_f2_ref[...])                              # [TB, 1]


# ---------------------- one-time parameter preparation -----------------------
def prepare_params(params):
    """Hoist transposes / slicing / block-diag assembly / dtype casts out of
    the forward pass (call once)."""
    f32, bf16 = jnp.float32, jnp.bfloat16
    wu = params["user_tower_w"].T.astype(bf16)    # [26, 32]
    wm = params["movie_tower_w"].T.astype(bf16)   # [17, 32]
    wg = params["genre_tower_w"].T.astype(bf16)   # [18, 16]

    # block-diagonal [61, 80] weight so the three small towers fuse into one dot
    w_umg = jnp.zeros((UMG_IN, UMG_OUT), bf16)
    w_umg = w_umg.at[:USER_IN, :USER_TOWER].set(wu)
    w_umg = w_umg.at[USER_IN:USER_IN + MOVIE_IN,
                     USER_TOWER:USER_TOWER + MOVIE_TOWER].set(wm)
    w_umg = w_umg.at[USER_IN + MOVIE_IN:,
                     USER_TOWER + MOVIE_TOWER:].set(wg)
    b_umg = jnp.concatenate([params["user_tower_b"],
                             params["movie_tower_b"],
                             params["genre_tower_b"]]).reshape(1, UMG_OUT).astype(f32)

    w_f1 = params["fusion1_w"].T                  # [112, 64]; rows 0:80 = umg, 80: = vision

    kp = {
        # embedding tables in bf16 so x_umg is assembled directly in bf16
        "user_embedding": params["user_embedding"].astype(bf16),
        "occ_embedding": params["occ_embedding"].astype(bf16),
        "movie_embedding": params["movie_embedding"].astype(bf16),
        "w_umg": w_umg,
        "b_umg": b_umg,
        "w_v": params["vision_tower_w"].T.astype(bf16),            # [1280, 32]
        "b_v": params["vision_tower_b"].reshape(1, VISION_TOWER).astype(f32),
        "w_f1_umg": w_f1[:UMG_OUT].astype(bf16),                   # [80, 64]
        "w_f1_v": w_f1[UMG_OUT:].astype(bf16),                     # [32, 64]
        "b_f1": params["fusion1_b"].reshape(1, FUSION_HIDDEN).astype(f32),
        # fusion-2 kept as a [1, 64] f32 row for the VPU reduce
        "w_f2": params["fusion2_w"].reshape(1, FUSION_HIDDEN).astype(f32),
        "b_f2": params["fusion2_b"].reshape(1, 1).astype(f32),
    }
    return jax.tree_util.tree_map(jnp.asarray, kp)


def _round_up(x, m):
    return ((x + m - 1) // m) * m


# ------------------------------- forward pass --------------------------------
def recommender_forward(batch, kp, *, max_batch_tile=2048):
    """Runs the MultimodalRecommender forward pass (use_vision=True).

    batch["vision_features"] should be the EfficientNet-B0 pooled features;
    supplying them in bf16 halves the dominant HBM stream (f32 also accepted
    and cast inside the kernel -- no extra wrapper-side HBM pass either way).
    """
    user_feat = batch["user_features"]      # [B, 4]  (user_idx, gender, age, occ_idx)
    movie_feat = batch["movie_features"]    # [B, 2]  (movie_idx, year)
    genre_feat = batch["genre_features"]    # [B, 18]
    vision_feat = batch["vision_features"]  # [B, 1280] (backbone output, bf16 or f32)

    bf16 = jnp.bfloat16

    # --- plain-JAX glue: embedding gathers + (tiny, bf16) feature concat -----
    user_idx = user_feat[:, 0].astype(jnp.int32)
    occ_idx = user_feat[:, 3].astype(jnp.int32)
    movie_idx = movie_feat[:, 0].astype(jnp.int32)
    gender = user_feat[:, 1:2].astype(bf16)
    age = user_feat[:, 2:3].astype(bf16)
    year = movie_feat[:, 1:2].astype(bf16)

    user_emb = jnp.take(kp["user_embedding"], user_idx, axis=0)    # bf16
    occ_emb = jnp.take(kp["occ_embedding"], occ_idx, axis=0)       # bf16
    movie_emb = jnp.take(kp["movie_embedding"], movie_idx, axis=0)  # bf16

    # single [B, 61] bf16 input for the fused user/movie/genre tower matmul
    x_umg = jnp.concatenate(
        [user_emb, gender, age, occ_emb, movie_emb, year, genre_feat.astype(bf16)],
        axis=1)

    B = x_umg.shape[0]

    # batch tile: as large as possible (amortizes per-step overhead); split into
    # >=2 grid steps on large batches so v7x can shard across both TensorCores.
    tb = min(max_batch_tile, _round_up(B, 8))
    if B >= 1024 and pl.cdiv(B, tb) < 2:
        tb = _round_up(pl.cdiv(B, 2), 8)
    grid = (pl.cdiv(B, tb),)   # partial last block handled by Pallas; no jnp.pad

    weights = (kp["w_umg"], kp["b_umg"], kp["w_v"], kp["b_v"],
               kp["w_f1_umg"], kp["w_f1_v"], kp["b_f1"],
               kp["w_f2"], kp["b_f2"])

    # rough VMEM footprint: double-buffered batch-tiled inputs/output + weights
    v_itemsize = jnp.dtype(vision_feat.dtype).itemsize
    vmem_need = (2 * tb * (2 * UMG_IN + v_itemsize * VISION_FEATS)   # inputs
                 + 2 * tb * 4                                        # output
                 + sum(w.size * jnp.dtype(w.dtype).itemsize for w in weights))
    cp_kwargs = dict(dimension_semantics=("parallel",))
    if vmem_need > (12 << 20):   # only raise when the default scoped limit is tight
        cp_kwargs["vmem_limit_bytes"] = int(min(vmem_need + (8 << 20), 100 << 20))

    def batch_spec(feat):
        return pl.BlockSpec((tb, feat), lambda i: (i, 0))

    def resident_spec(arr):   # weights: DMA'd once, stay resident across the grid
        return pl.BlockSpec(arr.shape, lambda i: (0, 0))

    out = pl.pallas_call(
        _recommender_kernel,
        out_shape=jax.ShapeDtypeStruct((B, 1), jnp.float32),
        grid=grid,
        in_specs=[batch_spec(UMG_IN), batch_spec(VISION_FEATS)]
                 + [resident_spec(w) for w in weights],
        out_specs=pl.BlockSpec((tb, 1), lambda i: (i, 0)),
        compiler_params=pltpu.CompilerParams(**cp_kwargs),
    )(x_umg, vision_feat, *weights)

    return out[:, 0]   # .squeeze(1)


# ----------------------------- parameter init --------------------------------
def init_params(key):
    ks = jax.random.split(key, 16)

    def linear(kw, kb, out_f, in_f):
        bound = 1.0 / jnp.sqrt(in_f)
        w = jax.random.uniform(kw, (out_f, in_f), jnp.float32, -bound, bound)
        b = jax.random.uniform(kb, (out_f,), jnp.float32, -bound, bound)
        return w, b

    params = {}
    params["user_embedding"] = jax.random.normal(ks[0], (NUM_USERS, USER_EMB), jnp.float32)
    params["occ_embedding"] = jax.random.normal(ks[1], (NUM_OCCUPATIONS, OCC_EMB), jnp.float32)
    params["movie_embedding"] = jax.random.normal(ks[2], (NUM_MOVIES, MOVIE_EMB), jnp.float32)

    params["user_tower_w"], params["user_tower_b"] = linear(ks[3], ks[4], USER_TOWER, USER_IN)
    params["movie_tower_w"], params["movie_tower_b"] = linear(ks[5], ks[6], MOVIE_TOWER, MOVIE_IN)
    params["genre_tower_w"], params["genre_tower_b"] = linear(ks[7], ks[8], GENRE_TOWER, GENRE_IN)
    params["vision_tower_w"], params["vision_tower_b"] = linear(ks[9], ks[10], VISION_TOWER, VISION_FEATS)

    params["fusion1_w"], params["fusion1_b"] = linear(ks[11], ks[12], FUSION_HIDDEN, FUSION_IN)
    params["fusion2_w"], params["fusion2_b"] = linear(ks[13], ks[14], 1, FUSION_HIDDEN)
    return params


# ----------------------------------- main ------------------------------------
if __name__ == "__main__":
    key = jax.random.PRNGKey(0)
    k_par, k_u, k_m, k_g, k_v, k_idx = jax.random.split(key, 6)

    B = 8
    params = init_params(k_par)
    kernel_params = prepare_params(params)   # one-time weight preparation

    user_idx = jax.random.randint(k_idx, (B,), 0, NUM_USERS).astype(jnp.float32)
    occ_idx = jax.random.randint(k_u, (B,), 0, NUM_OCCUPATIONS).astype(jnp.float32)
    gender = jax.random.bernoulli(k_u, 0.5, (B,)).astype(jnp.float32)
    age = jax.random.uniform(k_u, (B,), jnp.float32, 0.0, 1.0)
    user_features = jnp.stack([user_idx, gender, age, occ_idx], axis=1)       # [B, 4]

    movie_idx = jax.random.randint(k_m, (B,), 0, NUM_MOVIES).astype(jnp.float32)
    year = jax.random.uniform(k_m, (B,), jnp.float32, 0.0, 1.0)
    movie_features = jnp.stack([movie_idx, year], axis=1)                     # [B, 2]

    genre_features = jax.random.bernoulli(k_g, 0.3, (B, NUM_GENRES)).astype(jnp.float32)
    # backbone output supplied in bf16 (recommended: backbone emits bf16 directly)
    vision_features = jax.random.normal(k_v, (B, VISION_FEATS), jnp.float32).astype(jnp.bfloat16)

    batch = {
        "user_features": user_features,
        "movie_features": movie_features,
        "genre_features": genre_features,
        "vision_features": vision_features,
    }

    out = recommender_forward(batch, kernel_params)
    jax.block_until_ready(out)
    assert out.shape == (B,)
    assert bool(jnp.all(jnp.isfinite(out)))
    print("KERNEL_OK")
</pallas_src>

<mosaic_0001>
module attributes {stable_mosaic.version = 11 : i64} {
  func.func @_recommender_kernel(%arg0: i32, %arg1: memref<8x61xbf16, #tpu.memory_space<vmem>>, %arg2: memref<8x1280xbf16, #tpu.memory_space<vmem>>, %arg3: memref<61x80xbf16, #tpu.memory_space<vmem>>, %arg4: memref<1x80xf32, #tpu.memory_space<vmem>>, %arg5: memref<1280x32xbf16, #tpu.memory_space<vmem>>, %arg6: memref<1x32xf32, #tpu.memory_space<vmem>>, %arg7: memref<80x64xbf16, #tpu.memory_space<vmem>>, %arg8: memref<32x64xbf16, #tpu.memory_space<vmem>>, %arg9: memref<1x64xf32, #tpu.memory_space<vmem>>, %arg10: memref<1x64xf32, #tpu.memory_space<vmem>>, %arg11: memref<1x1xf32, #tpu.memory_space<vmem>>, %arg12: memref<8x1xf32, #tpu.memory_space<vmem>>) attributes {dimension_semantics = [#tpu.dimension_semantics<parallel>], iteration_bounds = array<i64: 1>, scalar_prefetch = 0 : i64, scratch_operands = 0 : i64, tpu.core_type = #tpu.core_type<tc>, window_params = [{transform_indices = @transform_0, window_bounds = array<i64: 8, 61>}, {transform_indices = @transform_1, window_bounds = array<i64: 8, 1280>}, {pipeline_mode = #tpu.pipeline_mode<synchronous>, transform_indices = @transform_2, window_bounds = array<i64: 61, 80>}, {pipeline_mode = #tpu.pipeline_mode<synchronous>, transform_indices = @transform_3, window_bounds = array<i64: 1, 80>}, {pipeline_mode = #tpu.pipeline_mode<synchronous>, transform_indices = @transform_4, window_bounds = array<i64: 1280, 32>}, {pipeline_mode = #tpu.pipeline_mode<synchronous>, transform_indices = @transform_5, window_bounds = array<i64: 1, 32>}, {pipeline_mode = #tpu.pipeline_mode<synchronous>, transform_indices = @transform_6, window_bounds = array<i64: 80, 64>}, {pipeline_mode = #tpu.pipeline_mode<synchronous>, transform_indices = @transform_7, window_bounds = array<i64: 32, 64>}, {pipeline_mode = #tpu.pipeline_mode<synchronous>, transform_indices = @transform_8, window_bounds = array<i64: 1, 64>}, {pipeline_mode = #tpu.pipeline_mode<synchronous>, transform_indices = @transform_9, window_bounds = array<i64: 1, 64>}, {pipeline_mode = #tpu.pipeline_mode<synchronous>, transform_indices = @transform_10, window_bounds = array<i64: 1, 1>}, {transform_indices = @transform_11, window_bounds = array<i64: 8, 1>}]} {
    %c0 = arith.constant 0 : index
    %c0_0 = arith.constant 0 : index
    %0 = vector.load %arg1[%c0, %c0_0] : memref<8x61xbf16, #tpu.memory_space<vmem>>, vector<8x61xbf16>
    %c0_1 = arith.constant 0 : index
    %c0_2 = arith.constant 0 : index
    %1 = vector.load %arg3[%c0_1, %c0_2] : memref<61x80xbf16, #tpu.memory_space<vmem>>, vector<61x80xbf16>
    %cst = arith.constant dense<0.000000e+00> : vector<8x80xf32>
    %2 = tpu.matmul %0, %1, %cst {dimension_numbers = #tpu.dot_dimension_numbers<[1], [0], [0], [1], [0, 0, 1, 1], [], []>} : vector<8x61xbf16>, vector<61x80xbf16>, vector<8x80xf32> -> vector<8x80xf32>
    %c0_3 = arith.constant 0 : index
    %c0_4 = arith.constant 0 : index
    %3 = vector.load %arg4[%c0_3, %c0_4] : memref<1x80xf32, #tpu.memory_space<vmem>>, vector<1x80xf32>
    %4 = vector.broadcast %3 : vector<1x80xf32> to vector<8x80xf32>
    %5 = arith.addf %2, %4 : vector<8x80xf32>
    %cst_5 = arith.constant 0.000000e+00 : f32
    %6 = vector.broadcast %cst_5 : f32 to vector<8x80xf32>
    %7 = arith.maximumf %5, %6 : vector<8x80xf32>
    %c0_6 = arith.constant 0 : index
    %c0_7 = arith.constant 0 : index
    %8 = vector.load %arg2[%c0_6, %c0_7] : memref<8x1280xbf16, #tpu.memory_space<vmem>>, vector<8x1280xbf16>
    %c0_8 = arith.constant 0 : index
    %c0_9 = arith.constant 0 : index
    %9 = vector.load %arg5[%c0_8, %c0_9] : memref<1280x32xbf16, #tpu.memory_space<vmem>>, vector<1280x32xbf16>
    %cst_10 = arith.constant dense<0.000000e+00> : vector<8x32xf32>
    %10 = tpu.matmul %8, %9, %cst_10 {dimension_numbers = #tpu.dot_dimension_numbers<[1], [0], [0], [1], [0, 0, 1, 1], [], []>} : vector<8x1280xbf16>, vector<1280x32xbf16>, vector<8x32xf32> -> vector<8x32xf32>
    %c0_11 = arith.constant 0 : index
    %c0_12 = arith.constant 0 : index
    %11 = vector.load %arg6[%c0_11, %c0_12] : memref<1x32xf32, #tpu.memory_space<vmem>>, vector<1x32xf32>
    %12 = vector.broadcast %11 : vector<1x32xf32> to vector<8x32xf32>
    %13 = arith.addf %10, %12 : vector<8x32xf32>
    %cst_13 = arith.constant 0.000000e+00 : f32
    %14 = vector.broadcast %cst_13 : f32 to vector<8x32xf32>
    %15 = arith.maximumf %13, %14 : vector<8x32xf32>
    %16 = arith.truncf %7 : vector<8x80xf32> to vector<8x80xbf16>
    %c0_14 = arith.constant 0 : index
    %c0_15 = arith.constant 0 : index
    %17 = vector.load %arg7[%c0_14, %c0_15] : memref<80x64xbf16, #tpu.memory_space<vmem>>, vector<80x64xbf16>
    %cst_16 = arith.constant dense<0.000000e+00> : vector<8x64xf32>
    %18 = tpu.matmul %16, %17, %cst_16 {dimension_numbers = #tpu.dot_dimension_numbers<[1], [0], [0], [1], [0, 0, 1, 1], [], []>} : vector<8x80xbf16>, vector<80x64xbf16>, vector<8x64xf32> -> vector<8x64xf32>
    %19 = arith.truncf %15 : vector<8x32xf32> to vector<8x32xbf16>
    %c0_17 = arith.constant 0 : index
    %c0_18 = arith.constant 0 : index
    %20 = vector.load %arg8[%c0_17, %c0_18] : memref<32x64xbf16, #tpu.memory_space<vmem>>, vector<32x64xbf16>
    %cst_19 = arith.constant dense<0.000000e+00> : vector<8x64xf32>
    %21 = tpu.matmul %19, %20, %cst_19 {dimension_numbers = #tpu.dot_dimension_numbers<[1], [0], [0], [1], [0, 0, 1, 1], [], []>} : vector<8x32xbf16>, vector<32x64xbf16>, vector<8x64xf32> -> vector<8x64xf32>
    %22 = arith.addf %18, %21 : vector<8x64xf32>
    %c0_20 = arith.constant 0 : index
    %c0_21 = arith.constant 0 : index
    %23 = vector.load %arg9[%c0_20, %c0_21] : memref<1x64xf32, #tpu.memory_space<vmem>>, vector<1x64xf32>
    %24 = vector.broadcast %23 : vector<1x64xf32> to vector<8x64xf32>
    %25 = arith.addf %22, %24 : vector<8x64xf32>
    %cst_22 = arith.constant 0.000000e+00 : f32
    %26 = vector.broadcast %cst_22 : f32 to vector<8x64xf32>
    %27 = arith.maximumf %25, %26 : vector<8x64xf32>
    %c0_23 = arith.constant 0 : index
    %c0_24 = arith.constant 0 : index
    %28 = vector.load %arg10[%c0_23, %c0_24] : memref<1x64xf32, #tpu.memory_space<vmem>>, vector<1x64xf32>
    %29 = vector.broadcast %28 : vector<1x64xf32> to vector<8x64xf32>
    %30 = arith.mulf %27, %29 : vector<8x64xf32>
    %cst_25 = arith.constant dense<0.000000e+00> : vector<8xf32>
    %31 = vector.multi_reduction <add>, %30, %cst_25 [1] : vector<8x64xf32> to vector<8xf32>
    %32 = vector.shape_cast %31 : vector<8xf32> to vector<8x1xf32>
    %c0_26 = arith.constant 0 : index
    %c0_27 = arith.constant 0 : index
    %33 = vector.load %arg11[%c0_26, %c0_27] : memref<1x1xf32, #tpu.memory_space<vmem>>, vector<1x1xf32>
    %34 = vector.broadcast %33 : vector<1x1xf32> to vector<8x1xf32>
    %35 = arith.addf %32, %34 : vector<8x1xf32>
    %c0_28 = arith.constant 0 : index
    %c0_29 = arith.constant 0 : index
    %36 = vector.load %arg12[%c0_28, %c0_29] : memref<8x1xf32, #tpu.memory_space<vmem>>, vector<8x1xf32>
    tpu.vector_store %arg12[%c0_28, %c0_29], %35 {strides = array<i32>} : memref<8x1xf32, #tpu.memory_space<vmem>>, vector<8x1xf32>,
    return
  }
  func.func @transform_0(%arg0: i32) -> (i32, i32) {
    %c0_i32 = arith.constant 0 : i32
    %c0_i32_0 = arith.constant 0 : i32
    return %arg0, %c0_i32 : i32, i32
  }
  func.func @transform_1(%arg0: i32) -> (i32, i32) {
    %c0_i32 = arith.constant 0 : i32
    %c0_i32_0 = arith.constant 0 : i32
    return %arg0, %c0_i32 : i32, i32
  }
  func.func @transform_2(%arg0: i32) -> (i32, i32) {
    %c0_i32 = arith.constant 0 : i32
    %c0_i32_0 = arith.constant 0 : i32
    %c0_i32_1 = arith.constant 0 : i32
    return %c0_i32, %c0_i32_0 : i32, i32
  }
  func.func @transform_3(%arg0: i32) -> (i32, i32) {
    %c0_i32 = arith.constant 0 : i32
    %c0_i32_0 = arith.constant 0 : i32
    %c0_i32_1 = arith.constant 0 : i32
    return %c0_i32, %c0_i32_0 : i32, i32
  }
  func.func @transform_4(%arg0: i32) -> (i32, i32) {
    %c0_i32 = arith.constant 0 : i32
    %c0_i32_0 = arith.constant 0 : i32
    %c0_i32_1 = arith.constant 0 : i32
    return %c0_i32, %c0_i32_0 : i32, i32
  }
  func.func @transform_5(%arg0: i32) -> (i32, i32) {
    %c0_i32 = arith.constant 0 : i32
    %c0_i32_0 = arith.constant 0 : i32
    %c0_i32_1 = arith.constant 0 : i32
    return %c0_i32, %c0_i32_0 : i32, i32
  }
  func.func @transform_6(%arg0: i32) -> (i32, i32) {
    %c0_i32 = arith.constant 0 : i32
    %c0_i32_0 = arith.constant 0 : i32
    %c0_i32_1 = arith.constant 0 : i32
    return %c0_i32, %c0_i32_0 : i32, i32
  }
  func.func @transform_7(%arg0: i32) -> (i32, i32) {
    %c0_i32 = arith.constant 0 : i32
    %c0_i32_0 = arith.constant 0 : i32
    %c0_i32_1 = arith.constant 0 : i32
    return %c0_i32, %c0_i32_0 : i32, i32
  }
  func.func @transform_8(%arg0: i32) -> (i32, i32) {
    %c0_i32 = arith.constant 0 : i32
    %c0_i32_0 = arith.constant 0 : i32
    %c0_i32_1 = arith.constant 0 : i32
    return %c0_i32, %c0_i32_0 : i32, i32
  }
  func.func @transform_9(%arg0: i32) -> (i32, i32) {
    %c0_i32 = arith.constant 0 : i32
    %c0_i32_0 = arith.constant 0 : i32
    %c0_i32_1 = arith.constant 0 : i32
    return %c0_i32, %c0_i32_0 : i32, i32
  }
  func.func @transform_10(%arg0: i32) -> (i32, i32) {
    %c0_i32 = arith.constant 0 : i32
    %c0_i32_0 = arith.constant 0 : i32
    %c0_i32_1 = arith.constant 0 : i32
    return %c0_i32, %c0_i32_0 : i32, i32
  }
  func.func @transform_11(%arg0: i32) -> (i32, i32) {
    %c0_i32 = arith.constant 0 : i32
    %c0_i32_0 = arith.constant 0 : i32
    return %arg0, %c0_i32 : i32, i32
  }
}

</mosaic_0001>

<llo_original>
// kernel: tpu_custom_call.1
$region0: #{tpu_custom_call.1}
  #allocation0 [shape = 'u32[]', space=smem, size = 0x4, offset = 0x4, fixed_abs, tag = 'smem constant byte address 0x4 - core index']
  #allocation1 [shape = 'u32[72,128]{1,0:T(1,128)}', space=vmem, size = 0x9000, scoped, tag = 'internal scratch']
  #allocation2 [shape = 'f32[1,1]{1,0:T(1,128)S(1)}', space=vmem, size = 0x200, scoped, tag = 'scoped memory for tpu_custom_call.1']
  %s0 = inlined_call_operand.vmem [shape: bf16[8,61], index: 0, kind: input, shape index: {}]
  %s1 = inlined_call_operand.vmem [shape: bf16[8,1280], index: 1, kind: input, shape index: {}]
  %s2 = inlined_call_operand.vmem [shape: bf16[61,80], index: 2, kind: input, shape index: {}]
  %s3 = inlined_call_operand.vmem [shape: f32[1,80], index: 3, kind: input, shape index: {}]
  %s4 = inlined_call_operand.vmem [shape: bf16[1280,32], index: 4, kind: input, shape index: {}]
  %s5 = inlined_call_operand.vmem [shape: f32[1,32], index: 5, kind: input, shape index: {}]
  %s6 = inlined_call_operand.vmem [shape: bf16[80,64], index: 6, kind: input, shape index: {}]
  %s7 = inlined_call_operand.vmem [shape: bf16[32,64], index: 7, kind: input, shape index: {}]
  %s8 = inlined_call_operand.vmem [shape: f32[1,64], index: 8, kind: input, shape index: {}]
  %s9 = inlined_call_operand.vmem [shape: f32[1,64], index: 9, kind: input, shape index: {}]
  %s10 = inlined_call_operand.<no memory space> [shape: f32[1,1], index: 10, kind: input, shape index: {}]
  %s11 = inlined_call_operand.vmem [shape: f32[8,1], index: 11, kind: output, shape index: {}]
  %s12 = sld [smem:[#allocation0]]
  $region54: #{tpu_custom_call.1} parent=0
    _
  %s14 = ssub.s32 1, %s12
  %s15 = scalar_select 0, %s14, %s12
  %v16 = vstv %s10
  %17 = vst [vmem:[#allocation2] sm:$0x1] %v16
  // Predicated region
  $region2: #{tpu_custom_call.1} parent=0 // pred_check
    _
  $region3: #{tpu_custom_call.1} parent=0 // pred_check_branch
    %19 = sbr.rel (0) target = $region5
  $region4: #{tpu_custom_call.1} parent=0 // pred_region
    _
  $region5: #{tpu_custom_call.1} parent=0 // pred_fallthru
    _
  // Predicated region
  $region6: #{tpu_custom_call.1} parent=0 // pred_check
    _
  $region7: #{tpu_custom_call.1} parent=0 // pred_check_branch
    %21 = sbr.rel (0) target = $region9
  $region8: #{tpu_custom_call.1} parent=0 // pred_region
    _
  $region9: #{tpu_custom_call.1} parent=0 // pred_fallthru
    _
  // Predicated region
  $region10: #{tpu_custom_call.1} parent=0 // pred_check
    _
  $region11: #{tpu_custom_call.1} parent=0 // pred_check_branch
    %23 = sbr.rel (0) target = $region13
  $region12: #{tpu_custom_call.1} parent=0 // pred_region
    _
  $region13: #{tpu_custom_call.1} parent=0 // pred_fallthru
    _
  // Predicated region
  $region14: #{tpu_custom_call.1} parent=0 // pred_check
    _
  $region15: #{tpu_custom_call.1} parent=0 // pred_check_branch
    %25 = sbr.rel (0) target = $region17
  $region16: #{tpu_custom_call.1} parent=0 // pred_region
    _
  $region17: #{tpu_custom_call.1} parent=0 // pred_fallthru
    _
  // Predicated region
  $region18: #{tpu_custom_call.1} parent=0 // pred_check
    _
  $region19: #{tpu_custom_call.1} parent=0 // pred_check_branch
    %27 = sbr.rel (0) target = $region21
  $region20: #{tpu_custom_call.1} parent=0 // pred_region
    _
  $region21: #{tpu_custom_call.1} parent=0 // pred_fallthru
    _
  // Predicated region
  $region22: #{tpu_custom_call.1} parent=0 // pred_check
    _
  $region23: #{tpu_custom_call.1} parent=0 // pred_check_branch
    %29 = sbr.rel (0) target = $region25
  $region24: #{tpu_custom_call.1} parent=0 // pred_region
    _
  $region25: #{tpu_custom_call.1} parent=0 // pred_fallthru
    _
  // Predicated region
  $region26: #{tpu_custom_call.1} parent=0 // pred_check
    _
  $region27: #{tpu_custom_call.1} parent=0 // pred_check_branch
    %31 = sbr.rel (0) target = $region29
  $region28: #{tpu_custom_call.1} parent=0 // pred_region
    _
  $region29: #{tpu_custom_call.1} parent=0 // pred_fallthru
    _
  // Predicated region
  $region30: #{tpu_custom_call.1} parent=0 // pred_check
    _
  $region31: #{tpu_custom_call.1} parent=0 // pred_check_branch
    %33 = sbr.rel (0) target = $region33
  $region32: #{tpu_custom_call.1} parent=0 // pred_region
    _
  $region33: #{tpu_custom_call.1} parent=0 // pred_fallthru
    _
  // Predicated region
  $region34: #{tpu_custom_call.1} parent=0 // pred_check
    _
  $region35: #{tpu_custom_call.1} parent=0 // pred_check_branch
    %35 = sbr.rel (0) target = $region37
  $region36: #{tpu_custom_call.1} parent=0 // pred_region
    _
  $region37: #{tpu_custom_call.1} parent=0 // pred_fallthru
    _
  // Predicated region
  $region38: #{tpu_custom_call.1} parent=0 // pred_check
    _
  $region39: #{tpu_custom_call.1} parent=0 // pred_check_branch
    %37 = sbr.rel (0) target = $region41
  $region40: #{tpu_custom_call.1} parent=0 // pred_region
    _
  $region41: #{tpu_custom_call.1} parent=0 // pred_fallthru
    _
  // Predicated region
  $region42: #{tpu_custom_call.1} parent=0 // pred_check
    _
  $region43: #{tpu_custom_call.1} parent=0 // pred_check_branch
    %39 = sbr.rel (0) target = $region45
  $region44: #{tpu_custom_call.1} parent=0 // pred_region
    _
  $region45: #{tpu_custom_call.1} parent=0 // pred_fallthru
    _
  %v41 = vld [vmem:[%s0] sm:$0xf]
  %v42 = vld [vmem:[%s2] sm:$0xf]
  %v43 = vld [vmem:[%s2 + $0x4] sm:$0xf]
  %v44 = vld [vmem:[%s2 + $0x8] sm:$0xf]
  %v45 = vld [vmem:[%s2 + $0xc] sm:$0xf]
  %v46 = vld [vmem:[%s2 + $0x10] sm:$0xf]
  %v47 = vld [vmem:[%s2 + $0x14] sm:$0xf]
  %v48 = vld [vmem:[%s2 + $0x18] sm:$0xf]
  %v49 = vld [vmem:[%s2 + $0x1c] sm:$0x7]
  %v50 = vld [vmem:[%s3] sm:$0x1]
  %v52 = vperm.slane %v50, 0
  %v62 = vunpack.c.l.b16 %v42
  %v63 = vunpack.c.l.b16 %v43
  %v64 = vunpack.c.l.b16 %v44
  %v65 = vunpack.c.l.b16 %v45
  %v66 = vunpack.c.l.b16 %v46
  %v67 = vunpack.c.l.b16 %v47
  %v68 = vunpack.c.l.b16 %v48
  %v69 = vunpack.c.l.b16 %v49
  %v70 = vpack.c.b16 %v63, %v62
  %v71 = vpack.c.b16 %v65, %v64
  %v72 = vpack.c.b16 %v67, %v66
  %v73 = vpack.c.b16 %v69, %v68
  %vm77 = vcmask 498688
  %v79 = vsel %vm77, %v41, 0
  %vm81 = vcmask 1045504
  %vm82 = vcmask 1046528
  %v83 = vsel %vm81, 4294967295, 65535
  %v84 = vsel %vm82, %v83, 0
  %v86 = vand.u32 %v73, %v84
  %88 = vmatpush.bf16.msra.mxu0 0
  %89 = vmatpush.bf16.msra.mxu0 0
  %90 = vmatpush.bf16.msra.mxu0 0
  %91 = vmatpush.bf16.msra.mxu0 0
  %92 = vmatpush.bf16.msra.mxu0 %v86
  %93 = vmatpush.bf16.msra.mxu0 %v72
  %94 = vmatpush.bf16.msra.mxu0 %v71
  %95 = vmatpush.bf16.msra.mxu0 %v70
  %96 = vmatmul.bf16.gmra.mxu0 %v79
  %v97 = vpop.f32.mrf.mxu0
  %v98 = vadd.f32 %v52, %v97
  %v99 = vpop.f32.mrf.mxu0
  %100 = vdwg.mxu0
  %v101 = vmax.f32 %v98, 0.0
  %v102 = vld [vmem:[%s1] sm:$0xff]
  %v103 = vld [vmem:[%s1 + $0x8] sm:$0xff]
  %v104 = vld [vmem:[%s1 + $0x10] sm:$0xff]
  %v105 = vld [vmem:[%s1 + $0x18] sm:$0xff]
  %v106 = vld [vmem:[%s1 + $0x20] sm:$0xff]
  %v107 = vld [vmem:[%s4] sm:$0xf]
  %v108 = vld [vmem:[%s4 + $0x4] sm:$0xf]
  %v109 = vld [vmem:[%s4 + $0x8] sm:$0xf]
  %v110 = vld [vmem:[%s4 + $0xc] sm:$0xf]
  %v111 = vld [vmem:[%s4 + $0x10] sm:$0xf]
  %v112 = vld [vmem:[%s4 + $0x14] sm:$0xf]
  %v113 = vld [vmem:[%s4 + $0x18] sm:$0xf]
  %v114 = vld [vmem:[%s4 + $0x1c] sm:$0xf]
  %v115 = vld [vmem:[%s4 + $0x20] sm:$0xf]
  %v116 = vld [vmem:[%s4 + $0x24] sm:$0xf]
  %v117 = vld [vmem:[%s4 + $0x28] sm:$0xf]
  %v118 = vld [vmem:[%s4 + $0x2c] sm:$0xf]
  %v119 = vld [vmem:[%s4 + $0x30] sm:$0xf]
  %v120 = vld [vmem:[%s4 + $0x34] sm:$0xf]
  %v121 = vld [vmem:[%s4 + $0x38] sm:$0xf]
  %v122 = vld [vmem:[%s4 + $0x3c] sm:$0xf]
  %v123 = vld [vmem:[%s4 + $0x40] sm:$0xf]
  %v124 = vld [vmem:[%s4 + $0x44] sm:$0xf]
  %v125 = vld [vmem:[%s4 + $0x48] sm:$0xf]
  %v126 = vld [vmem:[%s4 + $0x4c] sm:$0xf]
  %v127 = vld [vmem:[%s4 + $0x50] sm:$0xf]
  %v128 = vld [vmem:[%s4 + $0x54] sm:$0xf]
  %v129 = vld [vmem:[%s4 + $0x58] sm:$0xf]
  %v130 = vld [vmem:[%s4 + $0x5c] sm:$0xf]
  %v131 = vld [vmem:[%s4 + $0x60] sm:$0xf]
  %v132 = vld [vmem:[%s4 + $0x64] sm:$0xf]
  %v133 = vld [vmem:[%s4 + $0x68] sm:$0xf]
  %v134 = vld [vmem:[%s4 + $0x6c] sm:$0xf]
  %v135 = vld [vmem:[%s4 + $0x70] sm:$0xf]
  %v136 = vld [vmem:[%s4 + $0x74] sm:$0xf]
  %v137 = vld [vmem:[%s4 + $0x78] sm:$0xf]
  %v138 = vld [vmem:[%s4 + $0x7c] sm:$0xf]
  %v139 = vld [vmem:[%s4 + $0x80] sm:$0xf]
  %v140 = vld [vmem:[%s4 + $0x84] sm:$0xf]
  %v141 = vld [vmem:[%s4 + $0x88] sm:$0xf]
  %v142 = vld [vmem:[%s4 + $0x8c] sm:$0xf]
  %v143 = vld [vmem:[%s4 + $0x90] sm:$0xf]
  %v144 = vld [vmem:[%s4 + $0x94] sm:$0xf]
  %v145 = vld [vmem:[%s4 + $0x98] sm:$0xf]
  %v146 = vld [vmem:[%s4 + $0x9c] sm:$0xf]
  %v147 = vld [vmem:[%s4 + $0xa0] sm:$0xf]
  %v148 = vld [vmem:[%s4 + $0xa4] sm:$0xf]
  %v149 = vld [vmem:[%s4 + $0xa8] sm:$0xf]
  %v150 = vld [vmem:[%s4 + $0xac] sm:$0xf]
  %v151 = vld [vmem:[%s4 + $0xb0] sm:$0xf]
  %v152 = vld [vmem:[%s4 + $0xb4] sm:$0xf]
  %v153 = vld [vmem:[%s4 + $0xb8] sm:$0xf]
  %v154 = vld [vmem:[%s4 + $0xbc] sm:$0xf]
  %v155 = vld [vmem:[%s4 + $0xc0] sm:$0xf]
  %v156 = vld [vmem:[%s4 + $0xc4] sm:$0xf]
  %v157 = vld [vmem:[%s4 + $0xc8] sm:$0xf]
  %v158 = vld [vmem:[%s4 + $0xcc] sm:$0xf]
  %v159 = vld [vmem:[%s4 + $0xd0] sm:$0xf]
  %v160 = vld [vmem:[%s4 + $0xd4] sm:$0xf]
  %v161 = vld [vmem:[%s4 + $0xd8] sm:$0xf]
  %v162 = vld [vmem:[%s4 + $0xdc] sm:$0xf]
  %v163 = vld [vmem:[%s4 + $0xe0] sm:$0xf]
  %v164 = vld [vmem:[%s4 + $0xe4] sm:$0xf]
  %v165 = vld [vmem:[%s4 + $0xe8] sm:$0xf]
  %v166 = vld [vmem:[%s4 + $0xec] sm:$0xf]
  %v167 = vld [vmem:[%s4 + $0xf0] sm:$0xf]
  %v168 = vld [vmem:[%s4 + $0xf4] sm:$0xf]
  %v169 = vld [vmem:[%s4 + $0xf8] sm:$0xf]
  %v170 = vld [vmem:[%s4 + $0xfc] sm:$0xf]
  %v171 = vld [vmem:[%s4 + $0x100] sm:$0xf]
  %v172 = vld [vmem:[%s4 + $0x104] sm:$0xf]
  %v173 = vld [vmem:[%s4 + $0x108] sm:$0xf]
  %v174 = vld [vmem:[%s4 + $0x10c] sm:$0xf]
  %v175 = vld [vmem:[%s4 + $0x110] sm:$0xf]
  %v176 = vld [vmem:[%s4 + $0x114] sm:$0xf]
  %v177 = vld [vmem:[%s4 + $0x118] sm:$0xf]
  %v178 = vld [vmem:[%s4 + $0x11c] sm:$0xf]
  %v179 = vld [vmem:[%s4 + $0x120] sm:$0xf]
  %v180 = vld [vmem:[%s4 + $0x124] sm:$0xf]
  %v181 = vld [vmem:[%s4 + $0x128] sm:$0xf]
  %v182 = vld [vmem:[%s4 + $0x12c] sm:$0xf]
  %v183 = vld [vmem:[%s4 + $0x130] sm:$0xf]
  %v184 = vld [vmem:[%s4 + $0x134] sm:$0xf]
  %v185 = vld [vmem:[%s4 + $0x138] sm:$0xf]
  %v186 = vld [vmem:[%s4 + $0x13c] sm:$0xf]
  %v187 = vld [vmem:[%s4 + $0x140] sm:$0xf]
  %v188 = vld [vmem:[%s4 + $0x144] sm:$0xf]
  %v189 = vld [vmem:[%s4 + $0x148] sm:$0xf]
  %v190 = vld [vmem:[%s4 + $0x14c] sm:$0xf]
  %v191 = vld [vmem:[%s4 + $0x150] sm:$0xf]
  %v192 = vld [vmem:[%s4 + $0x154] sm:$0xf]
  %v193 = vld [vmem:[%s4 + $0x158] sm:$0xf]
  %v194 = vld [vmem:[%s4 + $0x15c] sm:$0xf]
  %v195 = vld [vmem:[%s4 + $0x160] sm:$0xf]
  %v196 = vld [vmem:[%s4 + $0x164] sm:$0xf]
  %v197 = vld [vmem:[%s4 + $0x168] sm:$0xf]
  %v198 = vld [vmem:[%s4 + $0x16c] sm:$0xf]
  %v199 = vld [vmem:[%s4 + $0x170] sm:$0xf]
  %v200 = vld [vmem:[%s4 + $0x174] sm:$0xf]
  %v201 = vld [vmem:[%s4 + $0x178] sm:$0xf]
  %v202 = vld [vmem:[%s4 + $0x17c] sm:$0xf]
  %v203 = vld [vmem:[%s4 + $0x180] sm:$0xf]
  %v204 = vld [vmem:[%s4 + $0x184] sm:$0xf]
  %v205 = vld [vmem:[%s4 + $0x188] sm:$0xf]
  %v206 = vld [vmem:[%s4 + $0x18c] sm:$0xf]
  %v207 = vld [vmem:[%s4 + $0x190] sm:$0xf]
  %v208 = vld [vmem:[%s4 + $0x194] sm:$0xf]
  %v209 = vld [vmem:[%s4 + $0x198] sm:$0xf]
  %v210 = vld [vmem:[%s4 + $0x19c] sm:$0xf]
  %v211 = vld [vmem:[%s4 + $0x1a0] sm:$0xf]
  %v212 = vld [vmem:[%s4 + $0x1a4] sm:$0xf]
  %v213 = vld [vmem:[%s4 + $0x1a8] sm:$0xf]
  %v214 = vld [vmem:[%s4 + $0x1ac] sm:$0xf]
  %v215 = vld [vmem:[%s4 + $0x1b0] sm:$0xf]
  %v216 = vld [vmem:[%s4 + $0x1b4] sm:$0xf]
  %v217 = vld [vmem:[%s4 + $0x1b8] sm:$0xf]
  %v218 = vld [vmem:[%s4 + $0x1bc] sm:$0xf]
  %v219 = vld [vmem:[%s4 + $0x1c0] sm:$0xf]
  %v220 = vld [vmem:[%s4 + $0x1c4] sm:$0xf]
  %v221 = vld [vmem:[%s4 + $0x1c8] sm:$0xf]
  %v222 = vld [vmem:[%s4 + $0x1cc] sm:$0xf]
  %v223 = vld [vmem:[%s4 + $0x1d0] sm:$0xf]
  %v224 = vld [vmem:[%s4 + $0x1d4] sm:$0xf]
  %v225 = vld [vmem:[%s4 + $0x1d8] sm:$0xf]
  %v226 = vld [vmem:[%s4 + $0x1dc] sm:$0xf]
  %v227 = vld [vmem:[%s4 + $0x1e0] sm:$0xf]
  %v228 = vld [vmem:[%s4 + $0x1e4] sm:$0xf]
  %v229 = vld [vmem:[%s4 + $0x1e8] sm:$0xf]
  %v230 = vld [vmem:[%s4 + $0x1ec] sm:$0xf]
  %v231 = vld [vmem:[%s4 + $0x1f0] sm:$0xf]
  %v232 = vld [vmem:[%s4 + $0x1f4] sm:$0xf]
  %v233 = vld [vmem:[%s4 + $0x1f8] sm:$0xf]
  %v234 = vld [vmem:[%s4 + $0x1fc] sm:$0xf]
  %v235 = vld [vmem:[%s4 + $0x200] sm:$0xf]
  %v236 = vld [vmem:[%s4 + $0x204] sm:$0xf]
  %v237 = vld [vmem:[%s4 + $0x208] sm:$0xf]
  %v238 = vld [vmem:[%s4 + $0x20c] sm:$0xf]
  %v239 = vld [vmem:[%s4 + $0x210] sm:$0xf]
  %v240 = vld [vmem:[%s4 + $0x214] sm:$0xf]
  %v241 = vld [vmem:[%s4 + $0x218] sm:$0xf]
  %v242 = vld [vmem:[%s4 + $0x21c] sm:$0xf]
  %v243 = vld [vmem:[%s4 + $0x220] sm:$0xf]
  %v244 = vld [vmem:[%s4 + $0x224] sm:$0xf]
  %v245 = vld [vmem:[%s4 + $0x228] sm:$0xf]
  %v246 = vld [vmem:[%s4 + $0x22c] sm:$0xf]
  %v247 = vld [vmem:[%s4 + $0x230] sm:$0xf]
  %v248 = vld [vmem:[%s4 + $0x234] sm:$0xf]
  %v249 = vld [vmem:[%s4 + $0x238] sm:$0xf]
  %v250 = vld [vmem:[%s4 + $0x23c] sm:$0xf]
  %v251 = vld [vmem:[%s4 + $0x240] sm:$0xf]
  %v252 = vld [vmem:[%s4 + $0x244] sm:$0xf]
  %v253 = vld [vmem:[%s4 + $0x248] sm:$0xf]
  %v254 = vld [vmem:[%s4 + $0x24c] sm:$0xf]
  %v255 = vld [vmem:[%s4 + $0x250] sm:$0xf]
  %v256 = vld [vmem:[%s4 + $0x254] sm:$0xf]
  %v257 = vld [vmem:[%s4 + $0x258] sm:$0xf]
  %v258 = vld [vmem:[%s4 + $0x25c] sm:$0xf]
  %v259 = vld [vmem:[%s4 + $0x260] sm:$0xf]
  %v260 = vld [vmem:[%s4 + $0x264] sm:$0xf]
  %v261 = vld [vmem:[%s4 + $0x268] sm:$0xf]
  %v262 = vld [vmem:[%s4 + $0x26c] sm:$0xf]
  %v263 = vld [vmem:[%s4 + $0x270] sm:$0xf]
  %v264 = vld [vmem:[%s4 + $0x274] sm:$0xf]
  %v265 = vld [vmem:[%s4 + $0x278] sm:$0xf]
  %v266 = vld [vmem:[%s4 + $0x27c] sm:$0xf]
  %v267 = vld [vmem:[%s5] sm:$0x1]
  %v269 = vperm.slane %v267, 0
  %v276 = vunpack.c.l.b16 %v102
  %v277 = vunpack.c.h.b16 %v102
  %v278 = vunpack.c.l.b16 %v103
  %v279 = vunpack.c.h.b16 %v103
  %v280 = vunpack.c.l.b16 %v104
  %v281 = vunpack.c.h.b16 %v104
  %v282 = vunpack.c.l.b16 %v105
  %v283 = vunpack.c.h.b16 %v105
  %v284 = vunpack.c.l.b16 %v106
  %v285 = vunpack.c.h.b16 %v106
  %v286 = vpack.c.b16 %v276, %v276
  %v287 = vpack.c.b16 %v277, %v277
  %v288 = vpack.c.b16 %v278, %v278
  %v289 = vpack.c.b16 %v279, %v279
  %v290 = vpack.c.b16 %v280, %v280
  %v291 = vpack.c.b16 %v281, %v281
  %v292 = vpack.c.b16 %v282, %v282
  %v293 = vpack.c.b16 %v283, %v283
  %v294 = vpack.c.b16 %v284, %v284
  %v295 = vpack.c.b16 %v285, %v285
  %v466 = vunpack.c.l.b16 %v107
  %v467 = vunpack.c.l.b16 %v108
  %v468 = vunpack.c.l.b16 %v109
  %v469 = vunpack.c.l.b16 %v110
  %v470 = vunpack.c.l.b16 %v111
  %v471 = vunpack.c.l.b16 %v112
  %v472 = vunpack.c.l.b16 %v113
  %v473 = vunpack.c.l.b16 %v114
  %v474 = vunpack.c.l.b16 %v115
  %v475 = vunpack.c.l.b16 %v116
  %v476 = vunpack.c.l.b16 %v117
  %v477 = vunpack.c.l.b16 %v118
  %v478 = vunpack.c.l.b16 %v119
  %v479 = vunpack.c.l.b16 %v120
  %v480 = vunpack.c.l.b16 %v121
  %v481 = vunpack.c.l.b16 %v122
  %v482 = vunpack.c.l.b16 %v123
  %v483 = vunpack.c.l.b16 %v124
  %v484 = vunpack.c.l.b16 %v125
  %v485 = vunpack.c.l.b16 %v126
  %v486 = vunpack.c.l.b16 %v127
  %v487 = vunpack.c.l.b16 %v128
  %v488 = vunpack.c.l.b16 %v129
  %v489 = vunpack.c.l.b16 %v130
  %v490 = vunpack.c.l.b16 %v131
  %v491 = vunpack.c.l.b16 %v132
  %v492 = vunpack.c.l.b16 %v133
  %v493 = vunpack.c.l.b16 %v134
  %v494 = vunpack.c.l.b16 %v135
  %v495 = vunpack.c.l.b16 %v136
  %v496 = vunpack.c.l.b16 %v137
  %v497 = vunpack.c.l.b16 %v138
  %v498 = vunpack.c.l.b16 %v139
  %v499 = vunpack.c.l.b16 %v140
  %v500 = vunpack.c.l.b16 %v141
  %v501 = vunpack.c.l.b16 %v142
  %v502 = vunpack.c.l.b16 %v143
  %v503 = vunpack.c.l.b16 %v144
  %v504 = vunpack.c.l.b16 %v145
  %v505 = vunpack.c.l.b16 %v146
  %v506 = vunpack.c.l.b16 %v147
  %v507 = vunpack.c.l.b16 %v148
  %v508 = vunpack.c.l.b16 %v149
  %v509 = vunpack.c.l.b16 %v150
  %v510 = vunpack.c.l.b16 %v151
  %v511 = vunpack.c.l.b16 %v152
  %v512 = vunpack.c.l.b16 %v153
  %v513 = vunpack.c.l.b16 %v154
  %v514 = vunpack.c.l.b16 %v155
  %v515 = vunpack.c.l.b16 %v156
  %v516 = vunpack.c.l.b16 %v157
  %v517 = vunpack.c.l.b16 %v158
  %v518 = vunpack.c.l.b16 %v159
  %v519 = vunpack.c.l.b16 %v160
  %v520 = vunpack.c.l.b16 %v161
  %v521 = vunpack.c.l.b16 %v162
  %v522 = vunpack.c.l.b16 %v163
  %v523 = vunpack.c.l.b16 %v164
  %v524 = vunpack.c.l.b16 %v165
  %v525 = vunpack.c.l.b16 %v166
  %v526 = vunpack.c.l.b16 %v167
  %v527 = vunpack.c.l.b16 %v168
  %v528 = vunpack.c.l.b16 %v169
  %v529 = vunpack.c.l.b16 %v170
  %v530 = vunpack.c.l.b16 %v171
  %v531 = vunpack.c.l.b16 %v172
  %v532 = vunpack.c.l.b16 %v173
  %v533 = vunpack.c.l.b16 %v174
  %v534 = vunpack.c.l.b16 %v175
  %v535 = vunpack.c.l.b16 %v176
  %v536 = vunpack.c.l.b16 %v177
  %v537 = vunpack.c.l.b16 %v178
  %v538 = vunpack.c.l.b16 %v179
  %v539 = vunpack.c.l.b16 %v180
  %v540 = vunpack.c.l.b16 %v181
  %v541 = vunpack.c.l.b16 %v182
  %v542 = vunpack.c.l.b16 %v183
  %v543 = vunpack.c.l.b16 %v184
  %v544 = vunpack.c.l.b16 %v185
  %v545 = vunpack.c.l.b16 %v186
  %v546 = vunpack.c.l.b16 %v187
  %v547 = vunpack.c.l.b16 %v188
  %v548 = vunpack.c.l.b16 %v189
  %v549 = vunpack.c.l.b16 %v190
  %v550 = vunpack.c.l.b16 %v191
  %v551 = vunpack.c.l.b16 %v192
  %v552 = vunpack.c.l.b16 %v193
  %v553 = vunpack.c.l.b16 %v194
  %v554 = vunpack.c.l.b16 %v195
  %v555 = vunpack.c.l.b16 %v196
  %v556 = vunpack.c.l.b16 %v197
  %v557 = vunpack.c.l.b16 %v198
  %v558 = vunpack.c.l.b16 %v199
  %v559 = vunpack.c.l.b16 %v200
  %v560 = vunpack.c.l.b16 %v201
  %v561 = vunpack.c.l.b16 %v202
  %v562 = vunpack.c.l.b16 %v203
  %v563 = vunpack.c.l.b16 %v204
  %v564 = vunpack.c.l.b16 %v205
  %v565 = vunpack.c.l.b16 %v206
  %v566 = vunpack.c.l.b16 %v207
  %v567 = vunpack.c.l.b16 %v208
  %v568 = vunpack.c.l.b16 %v209
  %v569 = vunpack.c.l.b16 %v210
  %v570 = vunpack.c.l.b16 %v211
  %v571 = vunpack.c.l.b16 %v212
  %v572 = vunpack.c.l.b16 %v213
  %v573 = vunpack.c.l.b16 %v214
  %v574 = vunpack.c.l.b16 %v215
  %v575 = vunpack.c.l.b16 %v216
  %v576 = vunpack.c.l.b16 %v217
  %v577 = vunpack.c.l.b16 %v218
  %v578 = vunpack.c.l.b16 %v219
  %v579 = vunpack.c.l.b16 %v220
  %v580 = vunpack.c.l.b16 %v221
  %v581 = vunpack.c.l.b16 %v222
  %v582 = vunpack.c.l.b16 %v223
  %v583 = vunpack.c.l.b16 %v224
  %v584 = vunpack.c.l.b16 %v225
  %v585 = vunpack.c.l.b16 %v226
  %v586 = vunpack.c.l.b16 %v227
  %v587 = vunpack.c.l.b16 %v228
  %v588 = vunpack.c.l.b16 %v229
  %v589 = vunpack.c.l.b16 %v230
  %v590 = vunpack.c.l.b16 %v231
  %v591 = vunpack.c.l.b16 %v232
  %v592 = vunpack.c.l.b16 %v233
  %v593 = vunpack.c.l.b16 %v234
  %v594 = vunpack.c.l.b16 %v235
  %v595 = vunpack.c.l.b16 %v236
  %v596 = vunpack.c.l.b16 %v237
  %v597 = vunpack.c.l.b16 %v238
  %v598 = vunpack.c.l.b16 %v239
  %v599 = vunpack.c.l.b16 %v240
  %v600 = vunpack.c.l.b16 %v241
  %v601 = vunpack.c.l.b16 %v242
  %v602 = vunpack.c.l.b16 %v243
  %v603 = vunpack.c.l.b16 %v244
  %v604 = vunpack.c.l.b16 %v245
  %v605 = vunpack.c.l.b16 %v246
  %v606 = vunpack.c.l.b16 %v247
  %v607 = vunpack.c.l.b16 %v248
  %v608 = vunpack.c.l.b16 %v249
  %v609 = vunpack.c.l.b16 %v250
  %v610 = vunpack.c.l.b16 %v251
  %v611 = vunpack.c.l.b16 %v252
  %v612 = vunpack.c.l.b16 %v253
  %v613 = vunpack.c.l.b16 %v254
  %v614 = vunpack.c.l.b16 %v255
  %v615 = vunpack.c.l.b16 %v256
  %v616 = vunpack.c.l.b16 %v257
  %v617 = vunpack.c.l.b16 %v258
  %v618 = vunpack.c.l.b16 %v259
  %v619 = vunpack.c.l.b16 %v260
  %v620 = vunpack.c.l.b16 %v261
  %v621 = vunpack.c.l.b16 %v262
  %v622 = vunpack.c.l.b16 %v263
  %v623 = vunpack.c.l.b16 %v264
  %v624 = vunpack.c.l.b16 %v265
  %v625 = vunpack.c.l.b16 %v266
  %v626 = vpack.c.b16 %v467, %v466
  %v627 = vpack.c.b16 %v469, %v468
  %v628 = vpack.c.b16 %v471, %v470
  %v629 = vpack.c.b16 %v473, %v472
  %v630 = vpack.c.b16 %v475, %v474
  %v631 = vpack.c.b16 %v477, %v476
  %v632 = vpack.c.b16 %v479, %v478
  %v633 = vpack.c.b16 %v481, %v480
  %v634 = vpack.c.b16 %v483, %v482
  %v635 = vpack.c.b16 %v485, %v484
  %v636 = vpack.c.b16 %v487, %v486
  %v637 = vpack.c.b16 %v489, %v488
  %v638 = vpack.c.b16 %v491, %v490
  %v639 = vpack.c.b16 %v493, %v492
  %v640 = vpack.c.b16 %v495, %v494
  %v641 = vpack.c.b16 %v497, %v496
  %v642 = vpack.c.b16 %v499, %v498
  %v643 = vpack.c.b16 %v501, %v500
  %v644 = vpack.c.b16 %v503, %v502
  %v645 = vpack.c.b16 %v505, %v504
  %v646 = vpack.c.b16 %v507, %v506
  %v647 = vpack.c.b16 %v509, %v508
  %v648 = vpack.c.b16 %v511, %v510
  %v649 = vpack.c.b16 %v513, %v512
  %v650 = vpack.c.b16 %v515, %v514
  %v651 = vpack.c.b16 %v517, %v516
  %v652 = vpack.c.b16 %v519, %v518
  %v653 = vpack.c.b16 %v521, %v520
  %v654 = vpack.c.b16 %v523, %v522
  %v655 = vpack.c.b16 %v525, %v524
  %v656 = vpack.c.b16 %v527, %v526
  %v657 = vpack.c.b16 %v529, %v528
  %v658 = vpack.c.b16 %v531, %v530
  %v659 = vpack.c.b16 %v533, %v532
  %v660 = vpack.c.b16 %v535, %v534
  %v661 = vpack.c.b16 %v537, %v536
  %v662 = vpack.c.b16 %v539, %v538
  %v663 = vpack.c.b16 %v541, %v540
  %v664 = vpack.c.b16 %v543, %v542
  %v665 = vpack.c.b16 %v545, %v544
  %v666 = vpack.c.b16 %v547, %v546
  %v667 = vpack.c.b16 %v549, %v548
  %v668 = vpack.c.b16 %v551, %v550
  %v669 = vpack.c.b16 %v553, %v552
  %v670 = vpack.c.b16 %v555, %v554
  %v671 = vpack.c.b16 %v557, %v556
  %v672 = vpack.c.b16 %v559, %v558
  %v673 = vpack.c.b16 %v561, %v560
  %v674 = vpack.c.b16 %v563, %v562
  %v675 = vpack.c.b16 %v565, %v564
  %v676 = vpack.c.b16 %v567, %v566
  %v677 = vpack.c.b16 %v569, %v568
  %v678 = vpack.c.b16 %v571, %v570
  %v679 = vpack.c.b16 %v573, %v572
  %v680 = vpack.c.b16 %v575, %v574
  %v681 = vpack.c.b16 %v577, %v576
  %v682 = vpack.c.b16 %v579, %v578
  %v683 = vpack.c.b16 %v581, %v580
  %v684 = vpack.c.b16 %v583, %v582
  %v685 = vpack.c.b16 %v585, %v584
  %v686 = vpack.c.b16 %v587, %v586
  %v687 = vpack.c.b16 %v589, %v588
  %v688 = vpack.c.b16 %v591, %v590
  %v689 = vpack.c.b16 %v593, %v592
  %v690 = vpack.c.b16 %v595, %v594
  %v691 = vpack.c.b16 %v597, %v596
  %v692 = vpack.c.b16 %v599, %v598
  %v693 = vpack.c.b16 %v601, %v600
  %v694 = vpack.c.b16 %v603, %v602
  %v695 = vpack.c.b16 %v605, %v604
  %v696 = vpack.c.b16 %v607, %v606
  %v697 = vpack.c.b16 %v609, %v608
  %v698 = vpack.c.b16 %v611, %v610
  %v699 = vpack.c.b16 %v613, %v612
  %v700 = vpack.c.b16 %v615, %v614
  %v701 = vpack.c.b16 %v617, %v616
  %v702 = vpack.c.b16 %v619, %v618
  %v703 = vpack.c.b16 %v621, %v620
  %v704 = vpack.c.b16 %v623, %v622
  %v705 = vpack.c.b16 %v625, %v624
  %786 = vmatpush.bf16.msra.mxu0 %v633
  %787 = vmatpush.bf16.msra.mxu0 %v632
  %788 = vmatpush.bf16.msra.mxu0 %v631
  %789 = vmatpush.bf16.msra.mxu0 %v630
  %790 = vmatpush.bf16.msra.mxu0 %v629
  %791 = vmatpush.bf16.msra.mxu0 %v628
  %792 = vmatpush.bf16.msra.mxu0 %v627
  %793 = vmatpush.bf16.msra.mxu0 %v626
  %794 = vmatmul.bf16.gmra.mxu0 %v286
  %v795 = vpop.f32.mrf.mxu0
  %v796 = vadd.f32 %v269, %v795
  %v797 = vpop.f32.mrf.mxu0
  %798 = vdwg.mxu0
  %799 = vmatpush.bf16.msra.mxu0 %v641
  %800 = vmatpush.bf16.msra.mxu0 %v640
  %801 = vmatpush.bf16.msra.mxu0 %v639
  %802 = vmatpush.bf16.msra.mxu0 %v638
  %803 = vmatpush.bf16.msra.mxu0 %v637
  %804 = vmatpush.bf16.msra.mxu0 %v636
  %805 = vmatpush.bf16.msra.mxu0 %v635
  %806 = vmatpush.bf16.msra.mxu0 %v634
  %807 = vmatmul.bf16.gmra.mxu0 %v287
  %v808 = vpop.f32.mrf.mxu0
  %v809 = vadd.f32 %v796, %v808
  %v810 = vpop.f32.mrf.mxu0
  %811 = vdwg.mxu0
  %812 = vmatpush.bf16.msra.mxu0 %v649
  %813 = vmatpush.bf16.msra.mxu0 %v648
  %814 = vmatpush.bf16.msra.mxu0 %v647
  %815 = vmatpush.bf16.msra.mxu0 %v646
  %816 = vmatpush.bf16.msra.mxu0 %v645
  %817 = vmatpush.bf16.msra.mxu0 %v644
  %818 = vmatpush.bf16.msra.mxu0 %v643
  %819 = vmatpush.bf16.msra.mxu0 %v642
  %820 = vmatmul.bf16.gmra.mxu0 %v288
  %v821 = vpop.f32.mrf.mxu0
  %v822 = vadd.f32 %v809, %v821
  %v823 = vpop.f32.mrf.mxu0
  %824 = vdwg.mxu0
  %825 = vmatpush.bf16.msra.mxu0 %v657
  %826 = vmatpush.bf16.msra.mxu0 %v656
  %827 = vmatpush.bf16.msra.mxu0 %v655
  %828 = vmatpush.bf16.msra.mxu0 %v654
  %829 = vmatpush.bf16.msra.mxu0 %v653
  %830 = vmatpush.bf16.msra.mxu0 %v652
  %831 = vmatpush.bf16.msra.mxu0 %v651
  %832 = vmatpush.bf16.msra.mxu0 %v650
  %833 = vmatmul.bf16.gmra.mxu0 %v289
  %v834 = vpop.f32.mrf.mxu0
  %v835 = vadd.f32 %v822, %v834
  %v836 = vpop.f32.mrf.mxu0
  %837 = vdwg.mxu0
  %838 = vmatpush.bf16.msra.mxu0 %v665
  %839 = vmatpush.bf16.msra.mxu0 %v664
  %840 = vmatpush.bf16.msra.mxu0 %v663
  %841 = vmatpush.bf16.msra.mxu0 %v662
  %842 = vmatpush.bf16.msra.mxu0 %v661
  %843 = vmatpush.bf16.msra.mxu0 %v660
  %844 = vmatpush.bf16.msra.mxu0 %v659
  %845 = vmatpush.bf16.msra.mxu0 %v658
  %846 = vmatmul.bf16.gmra.mxu0 %v290
  %v847 = vpop.f32.mrf.mxu0
  %v848 = vadd.f32 %v835, %v847
  %v849 = vpop.f32.mrf.mxu0
  %850 = vdwg.mxu0
  %851 = vmatpush.bf16.msra.mxu0 %v673
  %852 = vmatpush.bf16.msra.mxu0 %v672
  %853 = vmatpush.bf16.msra.mxu0 %v671
  %854 = vmatpush.bf16.msra.mxu0 %v670
  %855 = vmatpush.bf16.msra.mxu0 %v669
  %856 = vmatpush.bf16.msra.mxu0 %v668
  %857 = vmatpush.bf16.msra.mxu0 %v667
  %858 = vmatpush.bf16.msra.mxu0 %v666
  %859 = vmatmul.bf16.gmra.mxu0 %v291
  %v860 = vpop.f32.mrf.mxu0
  %v861 = vadd.f32 %v848, %v860
  %v862 = vpop.f32.mrf.mxu0
  %863 = vdwg.mxu0
  %864 = vmatpush.bf16.msra.mxu0 %v681
  %865 = vmatpush.bf16.msra.mxu0 %v680
  %866 = vmatpush.bf16.msra.mxu0 %v679
  %867 = vmatpush.bf16.msra.mxu0 %v678
  %868 = vmatpush.bf16.msra.mxu0 %v677
  %869 = vmatpush.bf16.msra.mxu0 %v676
  %870 = vmatpush.bf16.msra.mxu0 %v675
  %871 = vmatpush.bf16.msra.mxu0 %v674
  %872 = vmatmul.bf16.gmra.mxu0 %v292
  %v873 = vpop.f32.mrf.mxu0
  %v874 = vadd.f32 %v861, %v873
  %v875 = vpop.f32.mrf.mxu0
  %876 = vdwg.mxu0
  %877 = vmatpush.bf16.msra.mxu0 %v689
  %878 = vmatpush.bf16.msra.mxu0 %v688
  %879 = vmatpush.bf16.msra.mxu0 %v687
  %880 = vmatpush.bf16.msra.mxu0 %v686
  %881 = vmatpush.bf16.msra.mxu0 %v685
  %882 = vmatpush.bf16.msra.mxu0 %v684
  %883 = vmatpush.bf16.msra.mxu0 %v683
  %884 = vmatpush.bf16.msra.mxu0 %v682
  %885 = vmatmul.bf16.gmra.mxu0 %v293
  %v886 = vpop.f32.mrf.mxu0
  %v887 = vadd.f32 %v874, %v886
  %v888 = vpop.f32.mrf.mxu0
  %889 = vdwg.mxu0
  %890 = vmatpush.bf16.msra.mxu0 %v697
  %891 = vmatpush.bf16.msra.mxu0 %v696
  %892 = vmatpush.bf16.msra.mxu0 %v695
  %893 = vmatpush.bf16.msra.mxu0 %v694
  %894 = vmatpush.bf16.msra.mxu0 %v693
  %895 = vmatpush.bf16.msra.mxu0 %v692
  %896 = vmatpush.bf16.msra.mxu0 %v691
  %897 = vmatpush.bf16.msra.mxu0 %v690
  %898 = vmatmul.bf16.gmra.mxu0 %v294
  %v899 = vpop.f32.mrf.mxu0
  %v900 = vadd.f32 %v887, %v899
  %v901 = vpop.f32.mrf.mxu0
  %902 = vdwg.mxu0
  %903 = vmatpush.bf16.msra.mxu0 %v705
  %904 = vmatpush.bf16.msra.mxu0 %v704
  %905 = vmatpush.bf16.msra.mxu0 %v703
  %906 = vmatpush.bf16.msra.mxu0 %v702
  %907 = vmatpush.bf16.msra.mxu0 %v701
  %908 = vmatpush.bf16.msra.mxu0 %v700
  %909 = vmatpush.bf16.msra.mxu0 %v699
  %910 = vmatpush.bf16.msra.mxu0 %v698
  %911 = vmatmul.bf16.gmra.mxu0 %v295
  %v912 = vpop.f32.mrf.mxu0
  %v913 = vadd.f32 %v900, %v912
  %v914 = vpop.f32.mrf.mxu0
  %915 = vdwg.mxu0
  %v916 = vmax.f32 %v913, 0.0
  %v917 = vpack.c.bf16 %v101, %v101
  %v918 = vld [vmem:[%s6] sm:$0xf]
  %v919 = vld [vmem:[%s6 + $0x4] sm:$0xf]
  %v920 = vld [vmem:[%s6 + $0x8] sm:$0xf]
  %v921 = vld [vmem:[%s6 + $0xc] sm:$0xf]
  %v922 = vld [vmem:[%s6 + $0x10] sm:$0xf]
  %v923 = vld [vmem:[%s6 + $0x14] sm:$0xf]
  %v924 = vld [vmem:[%s6 + $0x18] sm:$0xf]
  %v925 = vld [vmem:[%s6 + $0x1c] sm:$0xf]
  %v926 = vld [vmem:[%s6 + $0x20] sm:$0xf]
  %v927 = vld [vmem:[%s6 + $0x24] sm:$0xf]
  %v928 = vpack.c.bf16 %v916, %v916
  %v929 = vld [vmem:[%s7] sm:$0xf]
  %v930 = vld [vmem:[%s7 + $0x4] sm:$0xf]
  %v931 = vld [vmem:[%s7 + $0x8] sm:$0xf]
  %v932 = vld [vmem:[%s7 + $0xc] sm:$0xf]
  %v937 = vunpack.c.l.b16 %v929
  %v938 = vunpack.c.l.b16 %v930
  %v939 = vunpack.c.l.b16 %v931
  %v940 = vunpack.c.l.b16 %v932
  %v941 = vpack.c.b16 %v938, %v937
  %v942 = vpack.c.b16 %v940, %v939
  %vm945 = vcmask 261120
  %v947 = vsel %vm945, %v928, 0
  %949 = vmatpush.bf16.msra.mxu0 0
  %950 = vmatpush.bf16.msra.mxu0 0
  %951 = vmatpush.bf16.msra.mxu0 0
  %952 = vmatpush.bf16.msra.mxu0 0
  %953 = vmatpush.bf16.msra.mxu0 0
  %954 = vmatpush.bf16.msra.mxu0 0
  %955 = vmatpush.bf16.msra.mxu0 %v942
  %956 = vmatpush.bf16.msra.mxu0 %v941
  %957 = vmatmul.bf16.gmra.mxu0 %v947
  %v958 = vpop.f32.mrf.mxu0
  %v959 = vadd.f32 0.0, %v958
  %v960 = vpop.f32.mrf.mxu0
  %961 = vdwg.mxu0
  %v972 = vunpack.c.l.b16 %v918
  %v973 = vunpack.c.l.b16 %v919
  %v974 = vunpack.c.l.b16 %v920
  %v975 = vunpack.c.l.b16 %v921
  %v976 = vunpack.c.l.b16 %v922
  %v977 = vunpack.c.l.b16 %v923
  %v978 = vunpack.c.l.b16 %v924
  %v979 = vunpack.c.l.b16 %v925
  %v980 = vunpack.c.l.b16 %v926
  %v981 = vunpack.c.l.b16 %v927
  %v982 = vpack.c.b16 %v973, %v972
  %v983 = vpack.c.b16 %v975, %v974
  %v984 = vpack.c.b16 %v977, %v976
  %v985 = vpack.c.b16 %v979, %v978
  %v986 = vpack.c.b16 %v981, %v980
  %vm992 = vcmask 654336
  %v994 = vsel %vm992, %v917, 0
  %996 = vmatpush.bf16.msra.mxu0 0
  %997 = vmatpush.bf16.msra.mxu0 0
  %998 = vmatpush.bf16.msra.mxu0 0
  %999 = vmatpush.bf16.msra.mxu0 %v986
  %1000 = vmatpush.bf16.msra.mxu0 %v985
  %1001 = vmatpush.bf16.msra.mxu0 %v984
  %1002 = vmatpush.bf16.msra.mxu0 %v983
  %1003 = vmatpush.bf16.msra.mxu0 %v982
  %1004 = vmatmul.bf16.gmra.mxu0 %v994
  %v1005 = vpop.f32.mrf.mxu0
  %v1006 = vadd.f32 %v959, %v1005
  %v1007 = vpop.f32.mrf.mxu0
  %1008 = vdwg.mxu0
  %v1009 = vld [vmem:[%s8] sm:$0x1]
  %v1011 = vperm.slane %v1009, 0
  %v1013 = vadd.f32 %v1006, %v1011
  %v1014 = vmax.f32 %v1013, 0.0
  %v1015 = vld [vmem:[%s9] sm:$0x1]
  %v1017 = vperm.slane %v1015, 0
  %v1019 = vmul.f32 %v1014, %v1017
  %vm1020 = vcmask 523264
  %v1021 = vsel %vm1020, %v1019, 0.0
  %1022 = vadd.xlane.f32.xlu0 %v1021
  %v1023 = vpop.xlane.xlu0 %1022
  %v1024 = vld [vmem:[#allocation2] sm:$0x1]
  %v1026 = vperm.slane %v1024, 0
  %v1028 = vadd.f32 %v1023, %v1026
  %vm1029 = vcmask 7168
  %1030 = vst.msk [vmem:[%s11] sm:$0xff] %vm1029, %v1028
  // Predicated region
  $region46: #{tpu_custom_call.1} parent=0 // pred_check
    _
  $region47: #{tpu_custom_call.1} parent=0 // pred_check_branch
    %1032 = sbr.rel (0) target = $region49
  $region48: #{tpu_custom_call.1} parent=0 // pred_region
    _
  $region49: #{tpu_custom_call.1} parent=0 // pred_fallthru
    _
  // Predicated region
  $region50: #{tpu_custom_call.1} parent=0 // pred_check
    _
  $region51: #{tpu_custom_call.1} parent=0 // pred_check_branch
    %1034 = sbr.rel (0) target = $region53
  $region52: #{tpu_custom_call.1} parent=0 // pred_region
    _
  $region53: #{tpu_custom_call.1} parent=0 // pred_fallthru
    _

</llo_original>
